<compile_context>
chip_gen: v6e
topology: v6e:2x2x1
jax: 0.10.0
libtpu: 0.0.40
codegen_flags: <defaults>
</compile_context>

<pallas_src>
import functools

import jax
import jax.numpy as jnp
from jax.experimental import pallas as pl
from jax.experimental.pallas import tpu as pltpu

_LANE = 128
_MAX_TILE_ROWS = 8192  # bytes-budget is the real bound; this is just a sanity cap


def _round_up(a: int, b: int) -> int:
    return ((a + b - 1) // b) * b


def _round_down(a: int, b: int) -> int:
    return (a // b) * b


def _sublane_multiple(dtype) -> int:
    # rows per packed sublane tile: f32 -> 8, bf16 -> 16, int8/fp8 -> 32
    return max(8, 32 // max(jnp.dtype(dtype).itemsize, 1))


def _vmem_budgets(vmem_capacity_bytes: int | None = None) -> tuple:
    """Returns (tile byte budget, vmem_limit_bytes) per TPU generation.

    Detection order: explicit capacity arg -> pltpu.get_tpu_info() (works when
    tracing/AOT-compiling off-device) -> device_kind sniffing -> conservative
    fallback that assumes the smallest per-TC VMEM (v7x, 64 MiB) so we never
    emit budgets that exceed physical VMEM on any target.
    """
    cap = vmem_capacity_bytes
    if cap is None:
        try:
            cap = int(pltpu.get_tpu_info().vmem_capacity_bytes)
        except Exception:
            cap = None
    if cap is None:
        try:
            kind = jax.devices()[0].device_kind.lower()
            if "v7" in kind or "7x" in kind:
                cap = 64 << 20
            elif "v5" in kind or "v6" in kind:
                cap = 128 << 20
        except Exception:
            cap = None
    if cap is None:
        cap = 64 << 20  # conservative: smallest per-TC VMEM (v7x)

    if cap <= (64 << 20):
        # v7x: HBM ~3.2 TB/s/TC makes each step's DMA short, so take big tiles
        # to amortise the ~0.35 us fixed per-step pipeline overhead.
        return 36 << 20, 56 << 20
    # v5e / v6e: 128 MiB physical VMEM; per-step overhead is already <4% at
    # ~48 MiB tiles, so a moderately larger budget is a small extra win.
    return 72 << 20, 100 << 20


def _rmsnorm_kernel(x_ref, w_ref, o_ref, *, eps: float, dim: int):
    """RMSNorm over the last axis of a (TR, D) row tile.

    D may be zero-padded beyond `dim` (only when dim < 128); the mean of
    squares always divides by the true `dim`, so padding never changes
    results.  Precision path matches torch: reduce/rsqrt in f32, downcast to
    x dtype, then scale by weight (with the usual dtype promotion).
    """
    x = x_ref[...].astype(jnp.float32)
    ss = jnp.sum(x * x, axis=-1, keepdims=True)        # XLU cross-lane reduce
    inv = jax.lax.rsqrt(ss * (1.0 / dim) + eps)        # EUP rsqrt (free slot)
    normed = (x * inv).astype(x_ref.dtype)             # .type_as(x)
    o_ref[...] = (normed * w_ref[...]).astype(o_ref.dtype)


def rmsnorm(x: jax.Array, weight: jax.Array, eps: float = 1e-6,
            row_tile: int | None = None,
            vmem_capacity_bytes: int | None = None) -> jax.Array:
    """RMSNorm over the last axis of x, scaled by weight (shape (dim,))."""
    orig_shape = x.shape
    dim = orig_shape[-1]
    assert weight.shape == (dim,), "weight must have shape (dim,)"

    rows = 1
    for s in orig_shape[:-1]:
        rows *= s
    rows = max(rows, 1)

    # torch promotion of (x-dtype * weight-dtype)
    out_dtype = jnp.promote_types(x.dtype, weight.dtype)
    in_bytes = jnp.dtype(x.dtype).itemsize
    out_bytes = jnp.dtype(out_dtype).itemsize

    x2d = x.reshape(rows, dim)
    w2d = weight.reshape(1, dim)

    # Pad the last dim only when it is smaller than one lane tile (128).
    # For dim >= 128, a block whose last dim equals the full array dim is
    # legal even if it is not a multiple of 128; skipping the pad avoids a
    # full extra HBM read+write of the input (jnp.pad) and of the output
    # (the post-call slice), which on a mem-bound kernel costs far more than
    # the masked tail vst it replaces.
    padded_dim = dim if dim >= _LANE else _LANE
    if padded_dim != dim:
        x2d = jnp.pad(x2d, ((0, 0), (0, padded_dim - dim)))
        w2d = jnp.pad(w2d, ((0, 0), (0, padded_dim - dim)))

    # Row tile: largest that fits the per-generation VMEM tile budget, rounded
    # to the dtype sublane packing.  Bytes (not a small row cap) bound the
    # tile; ragged tails are handled by the cdiv grid + masked OOB stores.
    sub = max(_sublane_multiple(x.dtype), _sublane_multiple(out_dtype))
    tile_budget, vmem_limit = _vmem_budgets(vmem_capacity_bytes)
    if row_tile is None:
        # 2x double-buffered input + 2x double-buffered output + ~16 B/elem of
        # in-kernel f32 / normed temporaries (headroom against spills).
        per_row = padded_dim * (2 * in_bytes + 2 * out_bytes + 16)
        row_tile = max(tile_budget // per_row, 1)
    tr = min(int(row_tile), _MAX_TILE_ROWS, _round_up(rows, sub))
    tr = max(_round_down(tr, sub), sub)

    grid = (pl.cdiv(rows, tr),)

    out2d = pl.pallas_call(
        functools.partial(_rmsnorm_kernel, eps=eps, dim=dim),
        out_shape=jax.ShapeDtypeStruct((rows, padded_dim), out_dtype),
        grid_spec=pltpu.PrefetchScalarGridSpec(
            num_scalar_prefetch=0,
            grid=grid,
            in_specs=[
                pl.BlockSpec((tr, padded_dim), lambda i: (i, 0)),  # x rows
                pl.BlockSpec((1, padded_dim), lambda i: (0, 0)),   # weight
            ],
            out_specs=pl.BlockSpec((tr, padded_dim), lambda i: (i, 0)),
        ),
        compiler_params=pltpu.CompilerParams(
            # TODO(synk): if an xprof trace on v7x shows only one TensorCore
            # busy, switch the row axis to pltpu.CORE_PARALLEL (or pl.core_map)
            # to shard the grid across both TCs explicitly.
            dimension_semantics=("parallel",),
            vmem_limit_bytes=vmem_limit,
        ),
    )(x2d, w2d)

    if padded_dim != dim:
        out2d = out2d[:, :dim]
    return out2d.reshape(orig_shape)


def _reference_rmsnorm(x, weight, eps):
    xf = x.astype(jnp.float32)
    ms = jnp.mean(xf * xf, axis=-1, keepdims=True)
    normed = (xf * jax.lax.rsqrt(ms + eps)).astype(x.dtype)
    return normed * weight


if __name__ == "__main__":
    key = jax.random.PRNGKey(0)
    k1, k2, k3, k4 = jax.random.split(key, 4)
    eps = 1e-6

    # Test 1: dim=32 (< 128) exercises the remaining lane-padding path.
    batch, seq, dim = 2, 8, 32
    x = jax.random.normal(k1, (batch, seq, dim), dtype=jnp.float32)
    weight = jnp.ones((dim,), dtype=jnp.float32)  # nn.Parameter(torch.ones(dim))

    out = jax.block_until_ready(rmsnorm(x, weight, eps))
    ref = _reference_rmsnorm(x, weight, eps)
    assert out.shape == x.shape and out.dtype == ref.dtype
    assert jnp.allclose(out, ref, atol=1e-5, rtol=1e-5)

    # Test 2: bf16 activations + f32 weight, ragged row count (15 rows),
    # lane-dense dim (256) -> exercises sublane packing, dtype promotion and
    # the cdiv/masked-tail path.
    x2 = jax.random.normal(k2, (3, 5, 256), dtype=jnp.bfloat16)
    w2 = (1.0 + 0.1 * jax.random.normal(k3, (256,), dtype=jnp.float32))
    out2 = jax.block_until_ready(rmsnorm(x2, w2, eps))
    ref2 = _reference_rmsnorm(x2, w2, eps)
    assert out2.shape == x2.shape and out2.dtype == ref2.dtype
    assert jnp.allclose(out2, ref2, atol=1e-2, rtol=1e-2)

    # Test 3: dim=192 (>= 128 but not a 128-multiple) -> exercises the new
    # unpadded path where the block's last dim equals the full array dim and
    # the tail lanes use masked stores.
    x3 = jax.random.normal(k4, (2, 8, 192), dtype=jnp.float32)
    w3 = jnp.ones((192,), dtype=jnp.float32)
    out3 = jax.block_until_ready(rmsnorm(x3, w3, eps))
    ref3 = _reference_rmsnorm(x3, w3, eps)
    assert out3.shape == x3.shape and out3.dtype == ref3.dtype
    assert jnp.allclose(out3, ref3, atol=1e-5, rtol=1e-5)

    print("KERNEL_OK")
</pallas_src>

<mosaic_0001>
module attributes {stable_mosaic.version = 11 : i64} {
  func.func @_rmsnorm_kernel(%arg0: i32, %arg1: memref<16x128xf32, #tpu.memory_space<vmem>>, %arg2: memref<1x128xf32, #tpu.memory_space<vmem>>, %arg3: memref<16x128xf32, #tpu.memory_space<vmem>>) attributes {dimension_semantics = [#tpu.dimension_semantics<parallel>], iteration_bounds = array<i64: 1>, scalar_prefetch = 0 : i64, scratch_operands = 0 : i64, tpu.core_type = #tpu.core_type<tc>, window_params = [{transform_indices = @transform_0, window_bounds = array<i64: 16, 128>}, {pipeline_mode = #tpu.pipeline_mode<synchronous>, transform_indices = @transform_1, window_bounds = array<i64: 1, 128>}, {transform_indices = @transform_2, window_bounds = array<i64: 16, 128>}]} {
    %c0 = arith.constant 0 : index
    %c0_0 = arith.constant 0 : index
    %0 = vector.load %arg1[%c0, %c0_0] : memref<16x128xf32, #tpu.memory_space<vmem>>, vector<16x128xf32>
    %1 = arith.mulf %0, %0 : vector<16x128xf32>
    %cst = arith.constant dense<0.000000e+00> : vector<16xf32>
    %2 = vector.multi_reduction <add>, %1, %cst [1] : vector<16x128xf32> to vector<16xf32>
    %3 = vector.shape_cast %2 : vector<16xf32> to vector<16x1xf32>
    %cst_1 = arith.constant 3.125000e-02 : f32
    %4 = vector.broadcast %cst_1 : f32 to vector<16x1xf32>
    %5 = arith.mulf %3, %4 : vector<16x1xf32>
    %cst_2 = arith.constant 9.99999997E-7 : f32
    %6 = vector.broadcast %cst_2 : f32 to vector<16x1xf32>
    %7 = arith.addf %5, %6 : vector<16x1xf32>
    %8 = math.rsqrt %7 : vector<16x1xf32>
    %9 = vector.broadcast %8 : vector<16x1xf32> to vector<16x128xf32>
    %10 = arith.mulf %0, %9 : vector<16x128xf32>
    %c0_3 = arith.constant 0 : index
    %c0_4 = arith.constant 0 : index
    %11 = vector.load %arg2[%c0_3, %c0_4] : memref<1x128xf32, #tpu.memory_space<vmem>>, vector<1x128xf32>
    %12 = vector.broadcast %11 : vector<1x128xf32> to vector<16x128xf32>
    %13 = arith.mulf %10, %12 : vector<16x128xf32>
    %c0_5 = arith.constant 0 : index
    %c0_6 = arith.constant 0 : index
    %14 = vector.load %arg3[%c0_5, %c0_6] : memref<16x128xf32, #tpu.memory_space<vmem>>, vector<16x128xf32>
    tpu.vector_store %arg3[%c0_5, %c0_6], %13 {strides = array<i32>} : memref<16x128xf32, #tpu.memory_space<vmem>>, vector<16x128xf32>,
    return
  }
  func.func @transform_0(%arg0: i32) -> (i32, i32) {
    %c0_i32 = arith.constant 0 : i32
    %c0_i32_0 = arith.constant 0 : i32
    return %arg0, %c0_i32 : i32, i32
  }
  func.func @transform_1(%arg0: i32) -> (i32, i32) {
    %c0_i32 = arith.constant 0 : i32
    %c0_i32_0 = arith.constant 0 : i32
    %c0_i32_1 = arith.constant 0 : i32
    return %c0_i32, %c0_i32_0 : i32, i32
  }
  func.func @transform_2(%arg0: i32) -> (i32, i32) {
    %c0_i32 = arith.constant 0 : i32
    %c0_i32_0 = arith.constant 0 : i32
    return %arg0, %c0_i32 : i32, i32
  }
}

</mosaic_0001>

<llo_original>
// kernel: tpu_custom_call.1
$region0: #{tpu_custom_call.1}
  #allocation0 [shape = 'u32[]', space=smem, size = 0x4, offset = 0x4, fixed_abs, tag = 'smem constant byte address 0x4 - core index']
  #allocation1 [shape = 'u32[144,128]{1,0:T(1,128)}', space=vmem, size = 0x12000, scoped, tag = 'internal scratch']
  %s0 = inlined_call_operand.hbm [shape: f32[16,128], index: 0, kind: input, shape index: {}]
  %s1 = inlined_call_operand.vmem [shape: f32[1,128], index: 1, kind: input, shape index: {}]
  %s2 = inlined_call_operand.hbm [shape: f32[16,128], index: 2, kind: output, shape index: {}]
  %s3 = sld [smem:[#allocation0]]
  $region22: #{tpu_custom_call.1} parent=0
    _
  %s5 = ssub.s32 1, %s3
  %s6 = scalar_select 0, %s5, %s3
  $region1: #{tpu_custom_call.1} parent=0
    #allocation2 [shape = 'u8[8192]{0}', space=vmem, size = 0x2000, scoped, tag = 'input window, operand 0, single buffered']
    #allocation3 [shape = 's32[1]{0}', space=sflag, size = 0x4, scoped, tag = 'scoped memory for tpu_custom_call.1']
    #allocation4 [shape = 's32[1]{0}', space=sflag, size = 0x4, scoped, tag = 'scoped memory for tpu_custom_call.1']
    #allocation5 [shape = 'u8[8192]{0}', space=vmem, size = 0x2000, scoped, tag = 'output window, operand 0, single buffered']
    %7 = vsyncpa [#allocation3], 0
    %8 = vsyncpa [#allocation4], 0
    // Predicated region
    $region2: #{tpu_custom_call.1} parent=1 // pred_check
      _
    $region3: #{tpu_custom_call.1} parent=1 // pred_check_branch
      %10 = sbr.rel (0) target = $region5
    $region4: #{tpu_custom_call.1} parent=1 // pred_region
      %s12 = ssub.s32 256, 256
      %13 = vsyncadd [#allocation3], %s12
      %s14 = sshll.u32 [#allocation2], 4
      %s15 = int_to_ptr.vmem [resolvable:$true] %s14
      %20 = dma.hbm_to_vmem [thread:$0]  %s0, 256, %s15, [#allocation3], 128, 128, 8
    $region5: #{tpu_custom_call.1} parent=1 // pred_fallthru
      _
    // Predicated region
    $region6: #{tpu_custom_call.1} parent=1 // pred_check
      _
    $region7: #{tpu_custom_call.1} parent=1 // pred_check_branch
      %22 = sbr.rel (0) target = $region9
    $region8: #{tpu_custom_call.1} parent=1 // pred_region
      _
    $region9: #{tpu_custom_call.1} parent=1 // pred_fallthru
      _
    // Predicated region
    $region10: #{tpu_custom_call.1} parent=1 // pred_check
      _
    $region11: #{tpu_custom_call.1} parent=1 // pred_check_branch
      %24 = sbr.rel (0) target = $region13
    $region12: #{tpu_custom_call.1} parent=1 // pred_region
      %25 = dma.done [#allocation3], 256
    $region13: #{tpu_custom_call.1} parent=1 // pred_fallthru
      _
    %v26 = vld [vmem:[#allocation2] sm:$0xff]
    %v27 = vld [vmem:[#allocation2 + $0x8] sm:$0xff]
    %v28 = vmul.f32 %v26, %v26
    %v29 = vmul.f32 %v27, %v27
    %30 = vadd.xlane.f32.xlu0 %v28
    %v31 = vpop.xlane.xlu0 %30
    %32 = vadd.xlane.f32.xlu0 %v29
    %v33 = vpop.xlane.xlu0 %32
    %v34 = vmul.f32 %v31, 0.03125
    %v35 = vmul.f32 %v33, 0.03125
    %v36 = vadd.f32 %v34, 1e-06
    %v37 = vadd.f32 %v35, 1e-06
    %v38 = vrsqrt.pop %v36
    %v39 = vrsqrt.pop %v37
    %v40 = vmul.f32 %v26, %v38
    %v41 = vmul.f32 %v27, %v39
    %v42 = vld [vmem:[%s1] sm:$0x1]
    %v44 = vlaneseq
    %v45 = vshrl.u32 %v44, 7
    %v46 = vsub.s32 0, %v45
    %v47 = vrot.slane %v42, %v46
    %v49 = vmul.f32 %v40, %v47
    %v50 = vmul.f32 %v41, %v47
    %51 = vst [vmem:[#allocation5] sm:$0xff] %v49
    %52 = vst [vmem:[#allocation5 + $0x8] sm:$0xff] %v50
    // Predicated region
    $region14: #{tpu_custom_call.1} parent=1 // pred_check
      _
    $region15: #{tpu_custom_call.1} parent=1 // pred_check_branch
      %54 = sbr.rel (0) target = $region17
    $region16: #{tpu_custom_call.1} parent=1 // pred_region
      %s56 = ssub.s32 256, 256
      %57 = vsyncadd [#allocation4], %s56
      %s58 = sshll.u32 [#allocation5], 4
      %s59 = int_to_ptr.vmem [resolvable:$true] %s58
      %64 = dma.vmem_to_hbm [thread:$0]  %s59, 256, %s2, [#allocation4], 128, 128, 8
    $region17: #{tpu_custom_call.1} parent=1 // pred_fallthru
      _
    // Predicated region
    $region18: #{tpu_custom_call.1} parent=1 // pred_check
      _
    $region19: #{tpu_custom_call.1} parent=1 // pred_check_branch
      %66 = sbr.rel (0) target = $region21
    $region20: #{tpu_custom_call.1} parent=1 // pred_region
      %67 = dma.done [#allocation4], 256
    $region21: #{tpu_custom_call.1} parent=1 // pred_fallthru
      _
    %68 = vsyncpa [#allocation3], 1
    %69 = vsyncpa [#allocation4], 1

</llo_original>
